<compile_context>
chip_gen: v7x
topology: tpu7x:2x2x1
jax: 0.10.0
libtpu: 0.0.40
codegen_flags: <defaults>
</compile_context>

<pallas_src>
import jax
import jax.numpy as jnp
from jax.experimental import pallas as pl
from jax.experimental.pallas import tpu as pltpu


def _round_up(x, m):
    return (x + m - 1) // m * m


def _cdiv(a, b):
    return -(-a // b)


def _vmem_capacity_bytes():
    try:
        return int(pltpu.get_tpu_info().vmem_capacity_bytes)
    except Exception:
        return 64 << 20  # conservative fallback (v7x per-TC VMEM)


def _switch_expert_kernel(x_ref, wi_ref, wo_ref, o_ref, acc_ref):
    # Refs (expert dim squeezed out):
    #   x_ref  : (tc, dm_p)    wi_ref : (dm_p, tf)
    #   wo_ref : (tf, dm_p)    o_ref  : (tc, dm_p)   acc_ref : (tc, dm_p) f32
    f = pl.program_id(2)
    nf = pl.num_programs(2)

    @pl.when(f == 0)
    def _():
        acc_ref[...] = jnp.zeros_like(acc_ref)

    # First GEMM on the MXU (f32 accumulation), ReLU on the VPU.
    h = jnp.dot(x_ref[...], wi_ref[...], preferred_element_type=jnp.float32)
    h = jnp.maximum(h, 0.0)                     # ACT2FN["relu"]
    # dropout (eval mode) == identity.

    # Second GEMM.  ReLU is elementwise over the d_ff partition, so tiling the
    # reduction this way is exact.  h is cast to the weight dtype between the
    # two GEMMs (matches torch bf16 bmm semantics); accumulation stays f32.
    partial = jnp.dot(h.astype(wo_ref.dtype), wo_ref[...],
                      preferred_element_type=jnp.float32)

    @pl.when(f < nf - 1)
    def _():
        acc_ref[...] += partial

    @pl.when(f == nf - 1)
    def _():
        # Fold the last partial straight into the output store: saves one
        # (tc, dm_p) f32 VMEM store + reload per (expert, c-tile).
        o_ref[...] = (acc_ref[...] + partial).astype(o_ref.dtype)


def switch_expert_forward(dispatched_states, fused_wi_weight, fused_wo_weight,
                          *, c_tile=None, f_tile=None):
    """dispatched_states: [E*C, d_model] or [E, C, d_model].

    c_tile: optional cap on the token tile per expert (default 1024; the whole
            capacity is taken when it fits so each weight byte crosses HBM
            once per expert).
    f_tile: optional cap on the d_ff reduction tile (default 4096; the actual
            tile is the largest 128-multiple dividing round_up(d_ff, 128) that
            fits the per-generation VMEM budget).
    """
    E, d_model, d_ff = fused_wi_weight.shape
    x = dispatched_states.reshape(E, -1, d_model)
    C = x.shape[1]
    dtype = x.dtype
    itemsize = jnp.dtype(dtype).itemsize

    # dtype-aware sublane multiple: 8 (f32) / 16 (bf16) / 32 (int8, fp8)
    sub = max(8, 32 // itemsize)

    dm_p = _round_up(d_model, 128)            # lane-dense K / N dim
    df_p = _round_up(d_ff, 128)               # padded reduction extent

    # ---- per-generation VMEM budget ----------------------------------------
    vmem_cap = _vmem_capacity_bytes()
    gen_cap = int(vmem_cap * 0.85)            # ~54 MiB on v7x, ~108 MiB v5e/v6e
    headroom = 4 << 20                        # compiler internal scratch
    budget = gen_cap - headroom

    def footprint(tc_, tf_):
        # double-buffered x, out, wi, wo tiles
        io = 2 * (2 * tc_ * dm_p + 2 * dm_p * tf_) * itemsize
        acc = tc_ * dm_p * 4                  # f32 accumulator scratch
        h = tc_ * tf_ * (4 + itemsize)        # f32 intermediate + cast copy
        return io + acc + h

    # ---- token tile: aim for C_tiles == 1 (weight-bandwidth roofline) ------
    tc_cap = c_tile if c_tile is not None else 1024
    tc = _round_up(min(_round_up(C, sub), _round_up(tc_cap, sub)), sub)

    # ---- d_ff tile: largest 128-multiple dividing df_p that fits VMEM ------
    tf_cap = max(f_tile if f_tile is not None else 4096, 128)
    units = df_p // 128
    tf_candidates = sorted(
        {d * 128 for d in range(1, units + 1) if units % d == 0 and d * 128 <= tf_cap},
        reverse=True)
    tf = None
    for cand in tf_candidates:
        if footprint(tc, cand) <= budget:
            tf = cand
            break
    if tf is None:
        # Even tf == 128 does not fit: shrink the token tile (re-streams
        # weights C_tiles times, but only when VMEM forces it).
        tf = 128
        while tc > sub and footprint(tc, tf) > budget:
            tc = _round_up(max(tc // 2, sub), sub)

    # ---- keep >= 2 parallel grid iterations for v7x's 2 TensorCores --------
    if E == 1 and _round_up(C, sub) >= 2 * sub and _round_up(C, tc) // tc == 1:
        tc = _round_up(_cdiv(_round_up(C, sub), 2), sub)

    c_p = _round_up(C, tc)
    c_tiles = c_p // tc
    f_tiles = df_p // tf

    # ---- zero-pad only when needed (zeros are exact no-ops through the net)
    if c_p != C or dm_p != d_model:
        x = jnp.pad(x, ((0, 0), (0, c_p - C), (0, dm_p - d_model)))
    wi = fused_wi_weight
    wo = fused_wo_weight
    if dm_p != d_model or df_p != d_ff:
        # TODO(synk): if weights genuinely need padding, do it once at init.
        wi = jnp.pad(wi, ((0, 0), (0, dm_p - d_model), (0, df_p - d_ff)))
        wo = jnp.pad(wo, ((0, 0), (0, df_p - d_ff), (0, dm_p - d_model)))

    vmem_limit = int(min(max(footprint(tc, tf) + headroom, 32 << 20), gen_cap))

    cost = pl.CostEstimate(
        flops=4 * E * c_p * dm_p * df_p,                       # two GEMMs
        bytes_accessed=int((2 * E * c_p * dm_p                 # x read + out write
                            + 2 * c_tiles * E * dm_p * df_p)   # wi + wo, re-streamed
                           * itemsize),
        transcendentals=0)

    out = pl.pallas_call(
        _switch_expert_kernel,
        out_shape=jax.ShapeDtypeStruct((E, c_p, dm_p), dtype),
        grid_spec=pltpu.PrefetchScalarGridSpec(
            num_scalar_prefetch=0,
            grid=(E, c_tiles, f_tiles),
            in_specs=[
                # x tile reused across the whole F reduction (DMA once per (e, c)).
                pl.BlockSpec((pl.Squeezed(), tc, dm_p),
                             lambda e, c, f: (e, c, 0)),
                pl.BlockSpec((pl.Squeezed(), dm_p, tf),
                             lambda e, c, f: (e, 0, f)),
                pl.BlockSpec((pl.Squeezed(), tf, dm_p),
                             lambda e, c, f: (e, f, 0)),
            ],
            out_specs=pl.BlockSpec((pl.Squeezed(), tc, dm_p),
                                   lambda e, c, f: (e, c, 0)),
            scratch_shapes=[pltpu.VMEM((tc, dm_p), jnp.float32)],
        ),
        compiler_params=pltpu.CompilerParams(
            dimension_semantics=("parallel", "parallel", "arbitrary"),
            vmem_limit_bytes=vmem_limit),
        cost_estimate=cost,
    )(x, wi, wo)

    # strip padding; matches wo_out.view(-1, d_model)
    if c_p != C or dm_p != d_model:
        out = out[:, :C, :d_model]
    return out.reshape(-1, d_model)


if __name__ == "__main__":
    # Small config consistent with the module.
    num_experts = 4
    d_model = 32
    d_ff = 64
    capacity = 8  # tokens per expert

    key = jax.random.PRNGKey(0)
    kx, kwi, kwo = jax.random.split(key, 3)

    # dispatched_states as the dense payload the module .view()s.
    x = jax.random.normal(kx, (num_experts * capacity, d_model),
                          dtype=jnp.float32)
    # Deterministic parameter init (shapes match registered fused weights).
    fused_wi_weight = 0.1 * jax.random.normal(
        kwi, (num_experts, d_model, d_ff), dtype=jnp.float32)
    fused_wo_weight = 0.1 * jax.random.normal(
        kwo, (num_experts, d_ff, d_model), dtype=jnp.float32)

    out = switch_expert_forward(x, fused_wi_weight, fused_wo_weight)
    out = jax.block_until_ready(out)

    # Pure-JAX reference check (bmm -> relu -> bmm).
    xr = x.reshape(num_experts, capacity, d_model)
    ref = jnp.einsum(
        "ecf,efd->ecd",
        jnp.maximum(jnp.einsum("ecd,edf->ecf", xr, fused_wi_weight), 0.0),
        fused_wo_weight,
    ).reshape(-1, d_model)
    assert out.shape == (num_experts * capacity, d_model)
    assert jnp.allclose(out, ref, atol=1e-4, rtol=1e-4)

    print("KERNEL_OK")
</pallas_src>

<mosaic_0001>
module attributes {stable_mosaic.version = 11 : i64} {
  func.func @_switch_expert_kernel(%arg0: i32, %arg1: i32, %arg2: i32, %arg3: memref<1x8x128xf32, #tpu.memory_space<vmem>>, %arg4: memref<1x128x128xf32, #tpu.memory_space<vmem>>, %arg5: memref<1x128x128xf32, #tpu.memory_space<vmem>>, %arg6: memref<1x8x128xf32, #tpu.memory_space<vmem>>, %arg7: memref<8x128xf32, #tpu.memory_space<vmem>>) attributes {dimension_semantics = [#tpu.dimension_semantics<parallel>, #tpu.dimension_semantics<parallel>, #tpu.dimension_semantics<arbitrary>], iteration_bounds = array<i64: 4, 1, 1>, scalar_prefetch = 0 : i64, scratch_operands = 1 : i64, tpu.core_type = #tpu.core_type<tc>, window_params = [{transform_indices = @transform_0, window_bounds = array<i64: 1, 8, 128>}, {transform_indices = @transform_1, window_bounds = array<i64: 1, 128, 128>}, {transform_indices = @transform_2, window_bounds = array<i64: 1, 128, 128>}, {transform_indices = @transform_3, window_bounds = array<i64: 1, 8, 128>}]} {
    %c0_i32 = arith.constant 0 : i32
    %0 = arith.cmpi eq, %arg2, %c0_i32 : i32
    %1 = arith.extui %0 : i1 to i32
    %c0_i32_0 = arith.constant 0 : i32
    %2 = arith.cmpi ne, %1, %c0_i32_0 : i32
    scf.if %2 {
      %cst_15 = arith.constant 0.000000e+00 : f32
      %19 = vector.broadcast %cst_15 : f32 to vector<8x128xf32>
      %c0_16 = arith.constant 0 : index
      %c0_17 = arith.constant 0 : index
      %20 = vector.load %arg7[%c0_16, %c0_17] : memref<8x128xf32, #tpu.memory_space<vmem>>, vector<8x128xf32>
      tpu.vector_store %arg7[%c0_16, %c0_17], %19 {strides = array<i32>} : memref<8x128xf32, #tpu.memory_space<vmem>>, vector<8x128xf32>,
    } else {
    }
    %c0 = arith.constant 0 : index
    %c0_1 = arith.constant 0 : index
    %c0_2 = arith.constant 0 : index
    %3 = vector.load %arg3[%c0, %c0_1, %c0_2] : memref<1x8x128xf32, #tpu.memory_space<vmem>>, vector<1x8x128xf32>
    %4 = vector.shape_cast %3 : vector<1x8x128xf32> to vector<8x128xf32>
    %c0_3 = arith.constant 0 : index
    %c0_4 = arith.constant 0 : index
    %c0_5 = arith.constant 0 : index
    %5 = vector.load %arg4[%c0_3, %c0_4, %c0_5] : memref<1x128x128xf32, #tpu.memory_space<vmem>>, vector<1x128x128xf32>
    %6 = vector.shape_cast %5 : vector<1x128x128xf32> to vector<128x128xf32>
    %cst = arith.constant dense<0.000000e+00> : vector<8x128xf32>
    %7 = tpu.matmul %4, %6, %cst {dimension_numbers = #tpu.dot_dimension_numbers<[1], [0], [0], [1], [0, 0, 1, 1], [], []>} : vector<8x128xf32>, vector<128x128xf32>, vector<8x128xf32> -> vector<8x128xf32>
    %cst_6 = arith.constant 0.000000e+00 : f32
    %8 = vector.broadcast %cst_6 : f32 to vector<8x128xf32>
    %9 = arith.maximumf %7, %8 : vector<8x128xf32>
    %c0_7 = arith.constant 0 : index
    %c0_8 = arith.constant 0 : index
    %c0_9 = arith.constant 0 : index
    %10 = vector.load %arg5[%c0_7, %c0_8, %c0_9] : memref<1x128x128xf32, #tpu.memory_space<vmem>>, vector<1x128x128xf32>
    %11 = vector.shape_cast %10 : vector<1x128x128xf32> to vector<128x128xf32>
    %cst_10 = arith.constant dense<0.000000e+00> : vector<8x128xf32>
    %12 = tpu.matmul %9, %11, %cst_10 {dimension_numbers = #tpu.dot_dimension_numbers<[1], [0], [0], [1], [0, 0, 1, 1], [], []>} : vector<8x128xf32>, vector<128x128xf32>, vector<8x128xf32> -> vector<8x128xf32>
    %c0_i32_11 = arith.constant 0 : i32
    %13 = arith.cmpi slt, %arg2, %c0_i32_11 : i32
    %14 = arith.extui %13 : i1 to i32
    %c0_i32_12 = arith.constant 0 : i32
    %15 = arith.cmpi ne, %14, %c0_i32_12 : i32
    scf.if %15 {
      %c0_15 = arith.constant 0 : index
      %c0_16 = arith.constant 0 : index
      %19 = vector.load %arg7[%c0_15, %c0_16] : memref<8x128xf32, #tpu.memory_space<vmem>>, vector<8x128xf32>
      %20 = arith.addf %19, %12 : vector<8x128xf32>
      %c0_17 = arith.constant 0 : index
      %c0_18 = arith.constant 0 : index
      %21 = vector.load %arg7[%c0_17, %c0_18] : memref<8x128xf32, #tpu.memory_space<vmem>>, vector<8x128xf32>
      tpu.vector_store %arg7[%c0_17, %c0_18], %20 {strides = array<i32>} : memref<8x128xf32, #tpu.memory_space<vmem>>, vector<8x128xf32>,
    } else {
    }
    %c0_i32_13 = arith.constant 0 : i32
    %16 = arith.cmpi eq, %arg2, %c0_i32_13 : i32
    %17 = arith.extui %16 : i1 to i32
    %c0_i32_14 = arith.constant 0 : i32
    %18 = arith.cmpi ne, %17, %c0_i32_14 : i32
    scf.if %18 {
      %c0_15 = arith.constant 0 : index
      %c0_16 = arith.constant 0 : index
      %19 = vector.load %arg7[%c0_15, %c0_16] : memref<8x128xf32, #tpu.memory_space<vmem>>, vector<8x128xf32>
      %20 = arith.addf %19, %12 : vector<8x128xf32>
      %c0_17 = arith.constant 0 : index
      %c0_18 = arith.constant 0 : index
      %c0_19 = arith.constant 0 : index
      %21 = vector.load %arg6[%c0_17, %c0_18, %c0_19] : memref<1x8x128xf32, #tpu.memory_space<vmem>>, vector<1x8x128xf32>
      %22 = vector.shape_cast %21 : vector<1x8x128xf32> to vector<8x128xf32>
      %23 = vector.shape_cast %20 : vector<8x128xf32> to vector<1x8x128xf32>
      tpu.vector_store %arg6[%c0_17, %c0_18, %c0_19], %23 {strides = array<i32>} : memref<1x8x128xf32, #tpu.memory_space<vmem>>, vector<1x8x128xf32>,
    } else {
    }
    return
  }
  func.func @transform_0(%arg0: i32, %arg1: i32, %arg2: i32) -> (i32, i32, i32) {
    %c0_i32 = arith.constant 0 : i32
    %c0_i32_0 = arith.constant 0 : i32
    return %arg0, %arg1, %c0_i32 : i32, i32, i32
  }
  func.func @transform_1(%arg0: i32, %arg1: i32, %arg2: i32) -> (i32, i32, i32) {
    %c0_i32 = arith.constant 0 : i32
    %c0_i32_0 = arith.constant 0 : i32
    return %arg0, %c0_i32, %arg2 : i32, i32, i32
  }
  func.func @transform_2(%arg0: i32, %arg1: i32, %arg2: i32) -> (i32, i32, i32) {
    %c0_i32 = arith.constant 0 : i32
    %c0_i32_0 = arith.constant 0 : i32
    return %arg0, %arg2, %c0_i32 : i32, i32, i32
  }
  func.func @transform_3(%arg0: i32, %arg1: i32, %arg2: i32) -> (i32, i32, i32) {
    %c0_i32 = arith.constant 0 : i32
    %c0_i32_0 = arith.constant 0 : i32
    return %arg0, %arg1, %c0_i32 : i32, i32, i32
  }
}

</mosaic_0001>

<llo_original>
// kernel: tpu_custom_call.1
$region0: #{tpu_custom_call.1}
  #allocation0 [shape = 'u32[]', space=smem, size = 0x4, offset = 0x4, fixed_abs, tag = 'smem constant byte address 0x4 - core index']
  #allocation1 [shape = 'u32[144,128]{1,0:T(1,128)}', space=vmem, size = 0x12000, scoped, tag = 'internal scratch']
  #allocation2 [shape = 'f32[8,128]{1,0:T(8,128)}', space=vmem, size = 0x1000, scoped, tag = 'scratch operand']
  %s0 = inlined_call_operand.hbm [shape: f32[4,8,128], index: 0, kind: input, shape index: {}]
  %s1 = inlined_call_operand.hbm [shape: f32[4,128,128], index: 1, kind: input, shape index: {}]
  %s2 = inlined_call_operand.hbm [shape: f32[4,128,128], index: 2, kind: input, shape index: {}]
  %s3 = inlined_call_operand.hbm [shape: f32[4,8,128], index: 3, kind: output, shape index: {}]
  %s4 = sld [smem:[#allocation0]]
  $region69: #{tpu_custom_call.1} parent=0
    _
  %s6 = ssub.s32 1, %s4
  %s7 = scalar_select 0, %s6, %s4
  $region1: #{tpu_custom_call.1} parent=0
    #allocation3 [shape = 'u8[8192]{0}', space=vmem, size = 0x2000, scoped, tag = 'input window, operand 0']
    #allocation4 [shape = 's32[2]{0}', space=sflag, size = 0x8, scoped, tag = 'scoped memory for tpu_custom_call.1']
    #allocation5 [shape = 's32[2]{0}', space=sflag, size = 0x8, scoped, tag = 'scoped memory for tpu_custom_call.1']
    #allocation6 [shape = 'u8[131072]{0}', space=vmem, size = 0x20000, scoped, tag = 'input window, operand 1']
    #allocation7 [shape = 's32[2]{0}', space=sflag, size = 0x8, scoped, tag = 'scoped memory for tpu_custom_call.1']
    #allocation8 [shape = 'u8[131072]{0}', space=vmem, size = 0x20000, scoped, tag = 'input window, operand 2']
    #allocation9 [shape = 'u8[8192]{0}', space=vmem, size = 0x2000, scoped, tag = 'output window, operand 0']
    %8 = vsyncpa [#allocation4], 0
    %s9 = scalar_lea.sflag [#allocation4], 1
    %10 = vsyncpa %s9, 0
    %11 = vsyncpa [#allocation7], 0
    %s12 = scalar_lea.sflag [#allocation7], 1
    %13 = vsyncpa %s12, 0
    %14 = vsyncpa [#allocation5], 0
    %s15 = scalar_lea.sflag [#allocation5], 1
    %16 = vsyncpa %s15, 0
    loop: start=0, step=1, limit=6
    $region2: #{tpu_custom_call.1} parent=1 // loop_pre_header
      _
    $region3: #{tpu_custom_call.1} parent=1 // loop_header
      %s18 = sphi 0, %s22
      %p19 = scmp.ge.s32.totalorder %s18, 6
      %s25 = sphi 0, %s44
      %s26 = sphi 0, %s40
      %s27 = sphi 0, %s36
      %s28 = sphi 0, %s25
      %s29 = sphi 0, %s26
      %s30 = sphi 0, %s27
      %s31 = sphi 0, %s28
      %s32 = sphi 0, %s29
      %s33 = sphi 0, %s30
      %s49 = sphi 0, %s51
      %s52 = sphi 0, %s49
      %s53 = sphi 0, %s52
      %s69 = sphi 0, %s53
      %s77 = sphi 0, %s79
      %s80 = sphi 0, %s77
      %s81 = sphi 0, %s80
      %s97 = sphi 0, %s81
      %s105 = sphi 0, %s107
      %s108 = sphi 0, %s105
      %s109 = sphi 0, %s108
      %s125 = sphi 0, %s109
      %s133 = sphi 0, %s135
      %s136 = sphi 0, %s133
      %s137 = sphi 0, %s136
      %s153 = sphi 0, %s137
    $region4: #{tpu_custom_call.1} parent=1 // loop_header_branch
      %21 = sbr.rel (%p19) target = $region8
    $region5: #{tpu_custom_call.1} parent=1 // loop_body
      %s23 = ssub.s32 %s18, 1
      %s24 = ssub.s32 %s18, 2
      %s34 = sadd.s32 1, %s27
      %p35 = scmp.ge.s32.totalorder %s34, 1
      %s36 = scalar_select %p35, 0, %s34
      %s37 = sadd.s32 1, %s26
      %s38 = scalar_select %p35, %s37, %s26
      %p39 = scmp.ge.s32.totalorder %s38, 1
      %s40 = scalar_select %p39, 0, %s38
      %s41 = sadd.s32 1, %s25
      %s42 = scalar_select %p39, %s41, %s25
      %p43 = scmp.ge.s32.totalorder %s42, 4
      %s44 = scalar_select %p43, 0, %s42
      %s45 = ssub.s32 %s25, %s44
      %s46 = ssub.s32 %s26, %s40
      %s47 = sor.u32 %s45, %s46
      %p48 = scmp.eq.s32.totalorder %s47, 0
      %s50 = sadd.s32 %s49, 1
      %s51 = scalar_select %p48, %s49, %s50
      %p54 = pneg %p48
      %p55 = scmp.eq.s32.totalorder %s18, 3
      %p56 = por %p54, %p55
      %p57 = scmp.ne.s32.totalorder %s49, %s52
      %p58 = scmp.eq.s32.totalorder %s18, 0
      %p59 = por %p57, %p58
      %p60 = scmp.ne.s32.totalorder %s49, %s52
      %p61 = scmp.eq.s32.totalorder %s23, 3
      %p62 = por %p60, %p61
      %p63 = scmp.ne.s32.totalorder %s52, %s53
      %p64 = scmp.eq.s32.totalorder %s23, 0
      %p65 = por %p63, %p64
      %p66 = scmp.ne.s32.totalorder %s52, %s53
      %p67 = scmp.eq.s32.totalorder %s24, 3
      %p68 = por %p66, %p67
      %p70 = scmp.ne.s32.totalorder %s53, %s69
      %p71 = scmp.eq.s32.totalorder %s24, 0
      %p72 = por %p70, %p71
      %s73 = ssub.s32 %s25, %s44
      %s74 = ssub.s32 %s27, %s36
      %s75 = sor.u32 %s73, %s74
      %p76 = scmp.eq.s32.totalorder %s75, 0
      %s78 = sadd.s32 %s77, 1
      %s79 = scalar_select %p76, %s77, %s78
      %p82 = pneg %p76
      %p83 = scmp.eq.s32.totalorder %s18, 3
      %p84 = por %p82, %p83
      %p85 = scmp.ne.s32.totalorder %s77, %s80
      %p86 = scmp.eq.s32.totalorder %s18, 0
      %p87 = por %p85, %p86
      %p88 = scmp.ne.s32.totalorder %s77, %s80
      %p89 = scmp.eq.s32.totalorder %s23, 3
      %p90 = por %p88, %p89
      %p91 = scmp.ne.s32.totalorder %s80, %s81
      %p92 = scmp.eq.s32.totalorder %s23, 0
      %p93 = por %p91, %p92
      %p94 = scmp.ne.s32.totalorder %s80, %s81
      %p95 = scmp.eq.s32.totalorder %s24, 3
      %p96 = por %p94, %p95
      %p98 = scmp.ne.s32.totalorder %s81, %s97
      %p99 = scmp.eq.s32.totalorder %s24, 0
      %p100 = por %p98, %p99
      %s101 = ssub.s32 %s25, %s44
      %s102 = ssub.s32 %s27, %s36
      %s103 = sor.u32 %s101, %s102
      %p104 = scmp.eq.s32.totalorder %s103, 0
      %s106 = sadd.s32 %s105, 1
      %s107 = scalar_select %p104, %s105, %s106
      %p110 = pneg %p104
      %p111 = scmp.eq.s32.totalorder %s18, 3
      %p112 = por %p110, %p111
      %p113 = scmp.ne.s32.totalorder %s105, %s108
      %p114 = scmp.eq.s32.totalorder %s18, 0
      %p115 = por %p113, %p114
      %p116 = scmp.ne.s32.totalorder %s105, %s108
      %p117 = scmp.eq.s32.totalorder %s23, 3
      %p118 = por %p116, %p117
      %p119 = scmp.ne.s32.totalorder %s108, %s109
      %p120 = scmp.eq.s32.totalorder %s23, 0
      %p121 = por %p119, %p120
      %p122 = scmp.ne.s32.totalorder %s108, %s109
      %p123 = scmp.eq.s32.totalorder %s24, 3
      %p124 = por %p122, %p123
      %p126 = scmp.ne.s32.totalorder %s109, %s125
      %p127 = scmp.eq.s32.totalorder %s24, 0
      %p128 = por %p126, %p127
      %s129 = ssub.s32 %s25, %s44
      %s130 = ssub.s32 %s26, %s40
      %s131 = sor.u32 %s129, %s130
      %p132 = scmp.eq.s32.totalorder %s131, 0
      %s134 = sadd.s32 %s133, 1
      %s135 = scalar_select %p132, %s133, %s134
      %p138 = pneg %p132
      %p139 = scmp.eq.s32.totalorder %s18, 3
      %p140 = por %p138, %p139
      %p141 = scmp.ne.s32.totalorder %s133, %s136
      %p142 = scmp.eq.s32.totalorder %s18, 0
      %p143 = por %p141, %p142
      %p144 = scmp.ne.s32.totalorder %s133, %s136
      %p145 = scmp.eq.s32.totalorder %s23, 3
      %p146 = por %p144, %p145
      %p147 = scmp.ne.s32.totalorder %s136, %s137
      %p148 = scmp.eq.s32.totalorder %s23, 0
      %p149 = por %p147, %p148
      %p150 = scmp.ne.s32.totalorder %s136, %s137
      %p151 = scmp.eq.s32.totalorder %s24, 3
      %p152 = por %p150, %p151
      %p154 = scmp.ne.s32.totalorder %s137, %s153
      %p155 = scmp.eq.s32.totalorder %s24, 0
      %p156 = por %p154, %p155
      %p157 = scmp.le.s32.totalorder 1, %s18
      %p158 = scmp.lt.s32.totalorder %s18, 5
      %p159 = pnand %p157, %p158
      %p160 = pneg %p159
      // Predicated region
      $region9: #{tpu_custom_call.1} parent=5 // pred_check
        _
      $region10: #{tpu_custom_call.1} parent=5 // pred_check_branch
        %162 = sbr.rel (%p159) target = $region12
      $region11: #{tpu_custom_call.1} parent=5 // pred_region
        %s163 = ssub.s32 %s18, 1
      $region12: #{tpu_custom_call.1} parent=5 // pred_fallthru
        _
      %p164 = scmp.lt.s32.totalorder %s18, 4
      // Predicated region
      $region13: #{tpu_custom_call.1} parent=5 // pred_check
        %p165 = pneg %p164
      $region14: #{tpu_custom_call.1} parent=5 // pred_check_branch
        %167 = sbr.rel (%p165) target = $region16
      $region15: #{tpu_custom_call.1} parent=5 // pred_region
        // Predicated region
        $region17: #{tpu_custom_call.1} parent=15 // pred_check
          %p168 = pneg %p59
        $region18: #{tpu_custom_call.1} parent=15 // pred_check_branch
          %170 = sbr.rel (%p168) target = $region20
        $region19: #{tpu_custom_call.1} parent=15 // pred_region
          %s171 = sand.u32 %s49, 1
          %s172 = scalar_lea.sflag [#allocation4], %s171
          %s173 = sand.u32 %s49, 1
          %s174 = smul.addr %s173, 8
          %s175 = scalar_lea.vmem [#allocation3], %s174
          %s177 = ssub.s32 128, 128
          %178 = vsyncadd %s172, %s177
          %s179 = sadd.s32 %s26, %s25
          %s180 = smul.addr %s179, 128
          %s181 = scalar_lea.hbm %s0, %s180
          %s183 = sshll.u32 %s175, 4
          %s184 = int_to_ptr.vmem [resolvable:$true] %s183
          %186 = dma.hbm_to_vmem [thread:$0]  %s181, 128, %s184, %s172
        $region20: #{tpu_custom_call.1} parent=15 // pred_fallthru
          _
        // Predicated region
        $region21: #{tpu_custom_call.1} parent=15 // pred_check
          %p187 = pneg %p87
        $region22: #{tpu_custom_call.1} parent=15 // pred_check_branch
          %189 = sbr.rel (%p187) target = $region24
        $region23: #{tpu_custom_call.1} parent=15 // pred_region
          %s190 = sand.u32 %s18, 1
          %s191 = scalar_lea.sflag [#allocation7], %s190
          %s192 = sand.u32 %s77, 1
          %s193 = smul.addr %s192, 128
          %s194 = scalar_lea.vmem [#allocation6], %s193
          %s196 = ssub.s32 2048, 2048
          %197 = vsyncadd %s191, %s196
          %s198 = smul.addr %s25, 16
          %s199 = sadd.s32 %s27, %s198
          %s200 = smul.addr %s199, 128
          %s201 = scalar_lea.hbm %s1, %s200
          %s202 = sshll.u32 %s194, 4
          %s203 = int_to_ptr.vmem [resolvable:$true] %s202
          %208 = dma.hbm_to_vmem [thread:$0]  %s201, 2048, %s203, %s191, 128, 128, 8
        $region24: #{tpu_custom_call.1} parent=15 // pred_fallthru
          _
        // Predicated region
        $region25: #{tpu_custom_call.1} parent=15 // pred_check
          %p209 = pneg %p115
        $region26: #{tpu_custom_call.1} parent=15 // pred_check_branch
          %211 = sbr.rel (%p209) target = $region28
        $region27: #{tpu_custom_call.1} parent=15 // pred_region
          %s212 = sand.u32 %s18, 1
          %s213 = scalar_lea.sflag [#allocation7], %s212
          %s214 = sand.u32 %s105, 1
          %s215 = smul.addr %s214, 128
          %s216 = scalar_lea.vmem [#allocation8], %s215
          %s217 = smul.u32 16, %s27
          %s219 = ssub.s32 2048, 2048
          %220 = vsyncadd %s213, %s219
          %s221 = smul.addr %s25, 16
          %s222 = sadd.s32 %s217, %s221
          %s223 = smul.addr %s222, 128
          %s224 = scalar_lea.hbm %s2, %s223
          %s225 = sshll.u32 %s216, 4
          %s226 = int_to_ptr.vmem [resolvable:$true] %s225
          %231 = dma.hbm_to_vmem [thread:$0]  %s224, 2048, %s226, %s213, 128, 128, 8
        $region28: #{tpu_custom_call.1} parent=15 // pred_fallthru
          _
      $region16: #{tpu_custom_call.1} parent=5 // pred_fallthru
        _
      %p232 = scmp.le.s32.totalorder 1, %s18
      %p233 = scmp.lt.s32.totalorder %s18, 5
      %p234 = pnand %p232, %p233
      %p235 = pneg %p234
      // Predicated region
      $region29: #{tpu_custom_call.1} parent=5 // pred_check
        _
      $region30: #{tpu_custom_call.1} parent=5 // pred_check_branch
        %237 = sbr.rel (%p234) target = $region32
      $region31: #{tpu_custom_call.1} parent=5 // pred_region
        %s238 = ssub.s32 %s18, 1
        %s239 = sand.u32 %s52, 1
        %s240 = scalar_lea.sflag [#allocation4], %s239
        %s241 = sand.u32 %s52, 1
        %s242 = smul.addr %s241, 8
        %s243 = scalar_lea.vmem [#allocation3], %s242
        // Predicated region
        $region33: #{tpu_custom_call.1} parent=31 // pred_check
          %p244 = pneg %p65
        $region34: #{tpu_custom_call.1} parent=31 // pred_check_branch
          %246 = sbr.rel (%p244) target = $region36
        $region35: #{tpu_custom_call.1} parent=31 // pred_region
          %247 = dma.done %s240, 128
        $region36: #{tpu_custom_call.1} parent=31 // pred_fallthru
          _
        %s248 = sand.u32 %s23, 1
        %s249 = scalar_lea.sflag [#allocation7], %s248
        %s250 = sand.u32 %s80, 1
        %s251 = smul.addr %s250, 128
        %s252 = scalar_lea.vmem [#allocation6], %s251
        // Predicated region
        $region37: #{tpu_custom_call.1} parent=31 // pred_check
          %p253 = pneg %p93
        $region38: #{tpu_custom_call.1} parent=31 // pred_check_branch
          %255 = sbr.rel (%p253) target = $region40
        $region39: #{tpu_custom_call.1} parent=31 // pred_region
          %256 = dma.done %s249, 2048
        $region40: #{tpu_custom_call.1} parent=31 // pred_fallthru
          _
        %s257 = sand.u32 %s23, 1
        %s258 = scalar_lea.sflag [#allocation7], %s257
        %s259 = sand.u32 %s108, 1
        %s260 = smul.addr %s259, 128
        %s261 = scalar_lea.vmem [#allocation8], %s260
        // Predicated region
        $region41: #{tpu_custom_call.1} parent=31 // pred_check
          %p262 = pneg %p121
        $region42: #{tpu_custom_call.1} parent=31 // pred_check_branch
          %264 = sbr.rel (%p262) target = $region44
        $region43: #{tpu_custom_call.1} parent=31 // pred_region
          %265 = dma.done %s258, 2048
        $region44: #{tpu_custom_call.1} parent=31 // pred_fallthru
          _
        %s266 = sand.u32 %s52, 1
        %s267 = scalar_lea.sflag [#allocation4], %s266
        %s268 = sand.u32 %s52, 1
        %s269 = smul.addr %s268, 8
        %s270 = scalar_lea.vmem [#allocation3], %s269
        %p271 = pneg %p65
        %p272 = pneg %p62
        %s273 = sand.u32 %s23, 1
        %s274 = scalar_lea.sflag [#allocation7], %s273
        %s275 = sand.u32 %s80, 1
        %s276 = smul.addr %s275, 128
        %s277 = scalar_lea.vmem [#allocation6], %s276
        %p278 = pneg %p93
        %p279 = pneg %p90
        %s280 = sand.u32 %s23, 1
        %s281 = scalar_lea.sflag [#allocation7], %s280
        %s282 = sand.u32 %s108, 1
        %s283 = smul.addr %s282, 128
        %s284 = scalar_lea.vmem [#allocation8], %s283
        %p285 = pneg %p121
        %p286 = pneg %p118
        %p287 = pneg %p149
        %p288 = pneg %p146
        %s289 = sand.u32 %s136, 1
        %s290 = scalar_lea.sflag [#allocation5], %s289
        %s291 = sand.u32 %s136, 1
        %s292 = smul.addr %s291, 8
        %s293 = scalar_lea.vmem [#allocation9], %s292
        %s294 = smul.u32 16, %s30
        %p295 = scmp.eq.s32.totalorder %s30, 0
        // Predicated region
        $region45: #{tpu_custom_call.1} parent=31 // pred_check
          %p296 = pneg %p295
        $region46: #{tpu_custom_call.1} parent=31 // pred_check_branch
          %298 = sbr.rel (%p296) target = $region48
        $region47: #{tpu_custom_call.1} parent=31 // pred_region
          %299 = vst [vmem:[#allocation2] sm:$0xff] 0.0
        $region48: #{tpu_custom_call.1} parent=31 // pred_fallthru
          _
        %v300 = vld [vmem:[%s243] sm:$0xff]
        %v301 = vld [vmem:[%s252] sm:$0xff]
        %v302 = vld [vmem:[%s252 + $0x8] sm:$0xff]
        %v303 = vld [vmem:[%s252 + $0x10] sm:$0xff]
        %v304 = vld [vmem:[%s252 + $0x18] sm:$0xff]
        %v305 = vld [vmem:[%s252 + $0x20] sm:$0xff]
        %v306 = vld [vmem:[%s252 + $0x28] sm:$0xff]
        %v307 = vld [vmem:[%s252 + $0x30] sm:$0xff]
        %v308 = vld [vmem:[%s252 + $0x38] sm:$0xff]
        %v309 = vld [vmem:[%s252 + $0x40] sm:$0xff]
        %v310 = vld [vmem:[%s252 + $0x48] sm:$0xff]
        %v311 = vld [vmem:[%s252 + $0x50] sm:$0xff]
        %v312 = vld [vmem:[%s252 + $0x58] sm:$0xff]
        %v313 = vld [vmem:[%s252 + $0x60] sm:$0xff]
        %v314 = vld [vmem:[%s252 + $0x68] sm:$0xff]
        %v315 = vld [vmem:[%s252 + $0x70] sm:$0xff]
        %v316 = vld [vmem:[%s252 + $0x78] sm:$0xff]
        %317 = vmatprep.subr.mxu0 0.0
        %318 = vmatpush1.msra.mxu0 %v301
        %319 = vmatprep.subr.mxu0 0.0
        %320 = vmatpush1.msra.mxu0 %v302
        %321 = vmatprep.subr.mxu0 0.0
        %322 = vmatpush1.msra.mxu0 %v303
        %323 = vmatprep.subr.mxu0 0.0
        %324 = vmatpush1.msra.mxu0 %v304
        %325 = vmatprep.subr.mxu0 0.0
        %326 = vmatpush1.msra.mxu0 %v305
        %327 = vmatprep.subr.mxu0 0.0
        %328 = vmatpush1.msra.mxu0 %v306
        %329 = vmatprep.subr.mxu0 0.0
        %330 = vmatpush1.msra.mxu0 %v307
        %331 = vmatprep.subr.mxu0 0.0
        %332 = vmatpush1.msra.mxu0 %v308
        %333 = vmatprep.subr.mxu0 0.0
        %334 = vmatpush1.msra.mxu0 %v309
        %335 = vmatprep.subr.mxu0 0.0
        %336 = vmatpush1.msra.mxu0 %v310
        %337 = vmatprep.subr.mxu0 0.0
        %338 = vmatpush1.msra.mxu0 %v311
        %339 = vmatprep.subr.mxu0 0.0
        %340 = vmatpush1.msra.mxu0 %v312
        %341 = vmatprep.subr.mxu0 0.0
        %342 = vmatpush1.msra.mxu0 %v313
        %343 = vmatprep.subr.mxu0 0.0
        %344 = vmatpush1.msra.mxu0 %v314
        %345 = vmatprep.subr.mxu0 0.0
        %346 = vmatpush1.msra.mxu0 %v315
        %347 = vmatprep.subr.mxu0 0.0
        %348 = vmatpush1.msra.mxu0 %v316
        %349 = vmatprep.subr.mxu0 0.0
        %350 = vmatpush1.msra.mxu0 0.0
        %351 = vmatprep.subr.mxu0 0.0
        %352 = vmatpush1.msra.mxu0 0.0
        %353 = vmatprep.subr.mxu0 0.0
        %354 = vmatpush1.msra.mxu0 0.0
        %355 = vmatprep.subr.mxu0 0.0
        %356 = vmatpush1.msra.mxu0 0.0
        %357 = vmatprep.subr.mxu0 0.0
        %358 = vmatpush1.msra.mxu0 0.0
        %359 = vmatprep.subr.mxu0 0.0
        %360 = vmatpush1.msra.mxu0 0.0
        %361 = vmatprep.subr.mxu0 0.0
        %362 = vmatpush1.msra.mxu0 0.0
        %363 = vmatprep.subr.mxu0 0.0
        %364 = vmatpush1.msra.mxu0 0.0
        %365 = vmatprep.subr.mxu0 0.0
        %366 = vmatpush1.msra.mxu0 0.0
        %367 = vmatprep.subr.mxu0 0.0
        %368 = vmatpush1.msra.mxu0 0.0
        %369 = vmatprep.subr.mxu0 0.0
        %370 = vmatpush1.msra.mxu0 0.0
        %371 = vmatprep.subr.mxu0 0.0
        %372 = vmatpush1.msra.mxu0 0.0
        %373 = vmatprep.subr.mxu0 0.0
        %374 = vmatpush1.msra.mxu0 0.0
        %375 = vmatprep.subr.mxu0 0.0
        %376 = vmatpush1.msra.mxu0 0.0
        %377 = vmatprep.subr.mxu0 0.0
        %378 = vmatpush1.msra.mxu0 0.0
        %379 = vmatprep.subr.mxu0 0.0
        %380 = vmatpush1.msra.mxu0 0.0
        %381 = vmatprep.mubr.f32.mxu0 0.0
        %382 = vmatmul.mubr.f32.gmra.mrb[0].mxu0 %v300
        %v383 = vpop.f32.mrb[0].mxu0
        %v384 = vadd.f32 0.0, %v383
        %v385 = vpop.f32.mrb[0].mxu0
        %386 = vdwg.mxu0
        %v387 = vmax.f32 %v384, 0.0
        %v388 = vld [vmem:[%s261] sm:$0xff]
        %v389 = vld [vmem:[%s261 + $0x8] sm:$0xff]
        %v390 = vld [vmem:[%s261 + $0x10] sm:$0xff]
        %v391 = vld [vmem:[%s261 + $0x18] sm:$0xff]
        %v392 = vld [vmem:[%s261 + $0x20] sm:$0xff]
        %v393 = vld [vmem:[%s261 + $0x28] sm:$0xff]
        %v394 = vld [vmem:[%s261 + $0x30] sm:$0xff]
        %v395 = vld [vmem:[%s261 + $0x38] sm:$0xff]
        %v396 = vld [vmem:[%s261 + $0x40] sm:$0xff]
        %v397 = vld [vmem:[%s261 + $0x48] sm:$0xff]
        %v398 = vld [vmem:[%s261 + $0x50] sm:$0xff]
        %v399 = vld [vmem:[%s261 + $0x58] sm:$0xff]
        %v400 = vld [vmem:[%s261 + $0x60] sm:$0xff]
        %v401 = vld [vmem:[%s261 + $0x68] sm:$0xff]
        %v402 = vld [vmem:[%s261 + $0x70] sm:$0xff]
        %v403 = vld [vmem:[%s261 + $0x78] sm:$0xff]
        %404 = vmatprep.subr.mxu0 0.0
        %405 = vmatpush1.msra.mxu0 %v388
        %406 = vmatprep.subr.mxu0 0.0
        %407 = vmatpush1.msra.mxu0 %v389
        %408 = vmatprep.subr.mxu0 0.0
        %409 = vmatpush1.msra.mxu0 %v390
        %410 = vmatprep.subr.mxu0 0.0
        %411 = vmatpush1.msra.mxu0 %v391
        %412 = vmatprep.subr.mxu0 0.0
        %413 = vmatpush1.msra.mxu0 %v392
        %414 = vmatprep.subr.mxu0 0.0
        %415 = vmatpush1.msra.mxu0 %v393
        %416 = vmatprep.subr.mxu0 0.0
        %417 = vmatpush1.msra.mxu0 %v394
        %418 = vmatprep.subr.mxu0 0.0
        %419 = vmatpush1.msra.mxu0 %v395
        %420 = vmatprep.subr.mxu0 0.0
        %421 = vmatpush1.msra.mxu0 %v396
        %422 = vmatprep.subr.mxu0 0.0
        %423 = vmatpush1.msra.mxu0 %v397
        %424 = vmatprep.subr.mxu0 0.0
        %425 = vmatpush1.msra.mxu0 %v398
        %426 = vmatprep.subr.mxu0 0.0
        %427 = vmatpush1.msra.mxu0 %v399
        %428 = vmatprep.subr.mxu0 0.0
        %429 = vmatpush1.msra.mxu0 %v400
        %430 = vmatprep.subr.mxu0 0.0
        %431 = vmatpush1.msra.mxu0 %v401
        %432 = vmatprep.subr.mxu0 0.0
        %433 = vmatpush1.msra.mxu0 %v402
        %434 = vmatprep.subr.mxu0 0.0
        %435 = vmatpush1.msra.mxu0 %v403
        %436 = vmatprep.subr.mxu0 0.0
        %437 = vmatpush1.msra.mxu0 0.0
        %438 = vmatprep.subr.mxu0 0.0
        %439 = vmatpush1.msra.mxu0 0.0
        %440 = vmatprep.subr.mxu0 0.0
        %441 = vmatpush1.msra.mxu0 0.0
        %442 = vmatprep.subr.mxu0 0.0
        %443 = vmatpush1.msra.mxu0 0.0
        %444 = vmatprep.subr.mxu0 0.0
        %445 = vmatpush1.msra.mxu0 0.0
        %446 = vmatprep.subr.mxu0 0.0
        %447 = vmatpush1.msra.mxu0 0.0
        %448 = vmatprep.subr.mxu0 0.0
        %449 = vmatpush1.msra.mxu0 0.0
        %450 = vmatprep.subr.mxu0 0.0
        %451 = vmatpush1.msra.mxu0 0.0
        %452 = vmatprep.subr.mxu0 0.0
        %453 = vmatpush1.msra.mxu0 0.0
        %454 = vmatprep.subr.mxu0 0.0
        %455 = vmatpush1.msra.mxu0 0.0
        %456 = vmatprep.subr.mxu0 0.0
        %457 = vmatpush1.msra.mxu0 0.0
        %458 = vmatprep.subr.mxu0 0.0
        %459 = vmatpush1.msra.mxu0 0.0
        %460 = vmatprep.subr.mxu0 0.0
        %461 = vmatpush1.msra.mxu0 0.0
        %462 = vmatprep.subr.mxu0 0.0
        %463 = vmatpush1.msra.mxu0 0.0
        %464 = vmatprep.subr.mxu0 0.0
        %465 = vmatpush1.msra.mxu0 0.0
        %466 = vmatprep.subr.mxu0 0.0
        %467 = vmatpush1.msra.mxu0 0.0
        %468 = vmatprep.mubr.f32.mxu0 0.0
        %469 = vmatmul.mubr.f32.gmra.mrb[0].mxu0 %v387
        %v470 = vpop.f32.mrb[0].mxu0
        %v471 = vadd.f32 0.0, %v470
        %v472 = vpop.f32.mrb[0].mxu0
        %473 = vdwg.mxu0
        %p474 = scmp.lt.s32.totalorder %s30, 0
        // Predicated region
        $region49: #{tpu_custom_call.1} parent=31 // pred_check
          %p475 = pneg %p474
        $region50: #{tpu_custom_call.1} parent=31 // pred_check_branch
          %477 = sbr.rel (%p475) target = $region52
        $region51: #{tpu_custom_call.1} parent=31 // pred_region
          %v478 = vld [vmem:[#allocation2] sm:$0xff]
          %v479 = vadd.f32 %v478, %v471
          %480 = vst [vmem:[#allocation2] sm:$0xff] %v479
        $region52: #{tpu_custom_call.1} parent=31 // pred_fallthru
          _
        // Predicated region
        $region53: #{tpu_custom_call.1} parent=31 // pred_check
          %p481 = pneg %p295
        $region54: #{tpu_custom_call.1} parent=31 // pred_check_branch
          %483 = sbr.rel (%p481) target = $region56
        $region55: #{tpu_custom_call.1} parent=31 // pred_region
          %v484 = vld [vmem:[#allocation2] sm:$0xff]
          %v485 = vadd.f32 %v484, %v471
          %486 = vst [vmem:[%s293] sm:$0xff] %v485
        $region56: #{tpu_custom_call.1} parent=31 // pred_fallthru
          _
        %s487 = sand.u32 %s136, 1
        %s488 = scalar_lea.sflag [#allocation5], %s487
        %s489 = sand.u32 %s136, 1
        %s490 = smul.addr %s489, 8
        %s491 = scalar_lea.vmem [#allocation9], %s490
        // Predicated region
        $region57: #{tpu_custom_call.1} parent=31 // pred_check
          %p492 = pneg %p146
        $region58: #{tpu_custom_call.1} parent=31 // pred_check_branch
          %494 = sbr.rel (%p492) target = $region60
        $region59: #{tpu_custom_call.1} parent=31 // pred_region
          %s496 = ssub.s32 128, 128
          %497 = vsyncadd %s488, %s496
          %s498 = sadd.s32 %s29, %s28
          %s499 = smul.addr %s498, 128
          %s500 = scalar_lea.hbm %s3, %s499
          %s502 = sshll.u32 %s491, 4
          %s503 = int_to_ptr.vmem [resolvable:$true] %s502
          %505 = dma.vmem_to_hbm [thread:$0]  %s503, 128, %s500, %s488
        $region60: #{tpu_custom_call.1} parent=31 // pred_fallthru
          _
      $region32: #{tpu_custom_call.1} parent=5 // pred_fallthru
        _
      %p506 = scmp.le.s32.totalorder 2, %s18
      // Predicated region
      $region61: #{tpu_custom_call.1} parent=5 // pred_check
        %p507 = pneg %p506
      $region62: #{tpu_custom_call.1} parent=5 // pred_check_branch
        %509 = sbr.rel (%p507) target = $region64
      $region63: #{tpu_custom_call.1} parent=5 // pred_region
        %s510 = ssub.s32 %s18, 2
        // Predicated region
        $region65: #{tpu_custom_call.1} parent=63 // pred_check
          %p511 = pneg %p152
        $region66: #{tpu_custom_call.1} parent=63 // pred_check_branch
          %513 = sbr.rel (%p511) target = $region68
        $region67: #{tpu_custom_call.1} parent=63 // pred_region
          %s514 = sand.u32 %s137, 1
          %s515 = scalar_lea.sflag [#allocation5], %s514
          %s516 = sand.u32 %s137, 1
          %s517 = smul.addr %s516, 8
          %s518 = scalar_lea.vmem [#allocation9], %s517
          %519 = dma.done %s515, 128
        $region68: #{tpu_custom_call.1} parent=63 // pred_fallthru
          _
      $region64: #{tpu_custom_call.1} parent=5 // pred_fallthru
        _
    $region6: #{tpu_custom_call.1} parent=1 // loop_footer
      %s22 = sadd.s32 1, %s18
    $region7: #{tpu_custom_call.1} parent=1 // loop_footer_branch
      %17 = sbr.rel target = $region3
    $region8: #{tpu_custom_call.1} parent=1 // loop_exit
      _
    %520 = vsyncpa [#allocation4], 1
    %s521 = scalar_lea.sflag [#allocation4], 1
    %522 = vsyncpa %s521, 1
    %523 = vsyncpa [#allocation7], 1
    %s524 = scalar_lea.sflag [#allocation7], 1
    %525 = vsyncpa %s524, 1
    %526 = vsyncpa [#allocation5], 1
    %s527 = scalar_lea.sflag [#allocation5], 1
    %528 = vsyncpa %s527, 1

</llo_original>
